<compile_context>
chip_gen: v7x
topology: tpu7x:2x2x1
jax: 0.10.0
libtpu: 0.0.40
codegen_flags: <defaults>
</compile_context>

<pallas_src>
import jax
import jax.numpy as jnp
from jax.experimental import pallas as pl
from jax.experimental.pallas import tpu as pltpu

K = 5            # conv kernel size
POOL = 2         # maxpool window / stride
C_OUT = 6        # conv out channels
KK = K * K       # 25 contraction taps
KK_PAD = 32      # padded contraction dim: 25 taps + 1 bias column + 6 zeros
LANES = 128      # lane-dense padded output-channel dim
TILE_M_CAP = 1024


def _cs1_kernel(p_ref, w_ref, o_ref):
    """p_ref: (4, TM, 32)  w_ref: (32, 128)  o_ref: (TM, 128)."""
    w = w_ref[...]
    # One MXU matmul per pool-window offset; bias rides in via the ones column.
    y0 = jnp.dot(p_ref[0], w, preferred_element_type=jnp.float32)
    y1 = jnp.dot(p_ref[1], w, preferred_element_type=jnp.float32)
    y2 = jnp.dot(p_ref[2], w, preferred_element_type=jnp.float32)
    y3 = jnp.dot(p_ref[3], w, preferred_element_type=jnp.float32)
    # tanh is monotone, so maxpool(tanh(x)) == tanh(maxpool(x)): pool the
    # pre-activations first (4x fewer EUP tanh evals), then one dense store.
    pooled = jnp.maximum(jnp.maximum(y0, y1), jnp.maximum(y2, y3))
    o_ref[...] = jnp.tanh(pooled).astype(o_ref.dtype)


def _im2col_pooled(x2d, N, PH, PW):
    """x2d: (N, H, W) -> (4, N*PH*PW, 25) via static strided slices (no gather)."""
    M = N * PH * PW
    offset_blocks = []
    for dy in range(POOL):
        for dx in range(POOL):
            taps = []
            for kh in range(K):
                for kw in range(K):
                    r0, c0 = dy + kh, dx + kw
                    sl = jax.lax.slice(
                        x2d,
                        (0, r0, c0),
                        (N, r0 + POOL * (PH - 1) + 1, c0 + POOL * (PW - 1) + 1),
                        (1, POOL, POOL),
                    )                                   # (N, PH, PW)
                    taps.append(sl.reshape(M))
            offset_blocks.append(jnp.stack(taps, axis=-1))    # (M, 25)
    return jnp.stack(offset_blocks, axis=0)                   # (4, M, 25)


@jax.jit
def cs1_forward(x, weight, bias):
    """x: (N, 1, H, W) f32; weight: (6, 1, 5, 5); bias: (6,). Returns NCHW."""
    N, C, H, W = x.shape
    assert C == 1, "CS1 expects a single input channel"
    OH, OW = H - K + 1, W - K + 1
    PH, PW = OH // POOL, OW // POOL
    M = N * PH * PW

    # ---- glue: im2col via static strided slices, pool-offset-major -------
    x2d = x[:, 0, :, :].astype(jnp.float32)
    p25 = _im2col_pooled(x2d, N, PH, PW)                      # (4, M, 25)
    ones = jnp.ones((POOL * POOL, M, 1), jnp.float32)         # bias column
    zpad = jnp.zeros((POOL * POOL, M, KK_PAD - KK - 1), jnp.float32)
    patches = jnp.concatenate([p25, ones, zpad], axis=-1)     # (4, M, 32)

    # Pick TILE_M and pad the M axis so blocks are (8, 128)-aligned.
    if M <= TILE_M_CAP:
        tile_m = ((M + 7) // 8) * 8
    else:
        tile_m = TILE_M_CAP
    m_pad = ((M + tile_m - 1) // tile_m) * tile_m
    if m_pad != M:
        patches = jnp.pad(patches, ((0, 0), (0, m_pad - M), (0, 0)))

    # Lane-dense weights: rows 0..24 = conv taps, row 25 = bias, rest zero;
    # columns 6..127 stay zero so padded lanes are deterministic zeros.
    w_mat = jnp.zeros((KK_PAD, LANES), jnp.float32)
    w_mat = w_mat.at[:KK, :C_OUT].set(
        weight.reshape(C_OUT, KK).T.astype(jnp.float32))
    w_mat = w_mat.at[KK, :C_OUT].set(bias.astype(jnp.float32))

    grid = (m_pad // tile_m,)
    cost = pl.CostEstimate(
        flops=2 * POOL * POOL * m_pad * KK_PAD * LANES,
        transcendentals=m_pad * LANES,
        bytes_accessed=4 * (POOL * POOL * m_pad * KK_PAD
                            + KK_PAD * LANES + m_pad * LANES),
    )

    pooled = pl.pallas_call(
        _cs1_kernel,
        out_shape=jax.ShapeDtypeStruct((m_pad, LANES), jnp.float32),
        grid=grid,
        in_specs=[
            pl.BlockSpec((POOL * POOL, tile_m, KK_PAD), lambda i: (0, i, 0)),
            pl.BlockSpec((KK_PAD, LANES), lambda i: (0, 0)),
        ],
        out_specs=pl.BlockSpec((tile_m, LANES), lambda i: (i, 0)),
        compiler_params=pltpu.CompilerParams(
            dimension_semantics=("parallel",)),
        cost_estimate=cost,
    )(patches, w_mat)

    # rows are (n, ph, pw)-major; slice real channels, then NHWC -> NCHW.
    out = pooled[:M, :C_OUT].reshape(N, PH, PW, C_OUT).transpose(0, 3, 1, 2)
    return out


def _reference(x, weight, bias):
    y = jax.lax.conv_general_dilated(
        x, weight, window_strides=(1, 1), padding="VALID",
        dimension_numbers=("NCHW", "OIHW", "NCHW"))
    y = jnp.tanh(y + bias.reshape(1, C_OUT, 1, 1))
    y = jax.lax.reduce_window(
        y, -jnp.inf, jax.lax.max,
        window_dimensions=(1, 1, POOL, POOL),
        window_strides=(1, 1, POOL, POOL),
        padding="VALID")
    return y


if __name__ == "__main__":
    key = jax.random.PRNGKey(0)
    kx, kw_, kb = jax.random.split(key, 3)

    # Small shapes consistent with the module: N=2, C_in=1, H=W=16.
    x = jax.random.normal(kx, (2, 1, 16, 16), dtype=jnp.float32)
    weight = 0.1 * jax.random.normal(kw_, (C_OUT, 1, K, K), dtype=jnp.float32)
    bias = 0.1 * jax.random.normal(kb, (C_OUT,), dtype=jnp.float32)

    out = cs1_forward(x, weight, bias)
    out = jax.block_until_ready(out)

    ref = jax.block_until_ready(_reference(x, weight, bias))
    assert out.shape == ref.shape == (2, C_OUT, 6, 6), out.shape
    assert jnp.allclose(out, ref, atol=1e-5, rtol=1e-5), "mismatch vs reference"

    print("KERNEL_OK")
</pallas_src>

<mosaic_0001>
module attributes {stable_mosaic.version = 11 : i64} {
  func.func @_cs1_kernel(%arg0: i32, %arg1: memref<4x72x32xf32, #tpu.memory_space<vmem>>, %arg2: memref<32x128xf32, #tpu.memory_space<vmem>>, %arg3: memref<72x128xf32, #tpu.memory_space<vmem>>) attributes {dimension_semantics = [#tpu.dimension_semantics<parallel>], iteration_bounds = array<i64: 1>, scalar_prefetch = 0 : i64, scratch_operands = 0 : i64, tpu.core_type = #tpu.core_type<tc>, window_params = [{transform_indices = @transform_0, window_bounds = array<i64: 4, 72, 32>}, {pipeline_mode = #tpu.pipeline_mode<synchronous>, transform_indices = @transform_1, window_bounds = array<i64: 32, 128>}, {transform_indices = @transform_2, window_bounds = array<i64: 72, 128>}]} {
    %c0 = arith.constant 0 : index
    %c0_0 = arith.constant 0 : index
    %0 = vector.load %arg2[%c0, %c0_0] : memref<32x128xf32, #tpu.memory_space<vmem>>, vector<32x128xf32>
    %c0_1 = arith.constant 0 : index
    %c0_2 = arith.constant 0 : index
    %c0_3 = arith.constant 0 : index
    %1 = vector.load %arg1[%c0_1, %c0_2, %c0_3] : memref<4x72x32xf32, #tpu.memory_space<vmem>>, vector<1x72x32xf32>
    %2 = vector.shape_cast %1 : vector<1x72x32xf32> to vector<72x32xf32>
    %cst = arith.constant dense<0.000000e+00> : vector<72x128xf32>
    %3 = tpu.matmul %2, %0, %cst {dimension_numbers = #tpu.dot_dimension_numbers<[1], [0], [0], [1], [0, 0, 1, 1], [], []>} : vector<72x32xf32>, vector<32x128xf32>, vector<72x128xf32> -> vector<72x128xf32>
    %c1 = arith.constant 1 : index
    %c0_4 = arith.constant 0 : index
    %c0_5 = arith.constant 0 : index
    %4 = vector.load %arg1[%c1, %c0_4, %c0_5] : memref<4x72x32xf32, #tpu.memory_space<vmem>>, vector<1x72x32xf32>
    %5 = vector.shape_cast %4 : vector<1x72x32xf32> to vector<72x32xf32>
    %cst_6 = arith.constant dense<0.000000e+00> : vector<72x128xf32>
    %6 = tpu.matmul %5, %0, %cst_6 {dimension_numbers = #tpu.dot_dimension_numbers<[1], [0], [0], [1], [0, 0, 1, 1], [], []>} : vector<72x32xf32>, vector<32x128xf32>, vector<72x128xf32> -> vector<72x128xf32>
    %c2 = arith.constant 2 : index
    %c0_7 = arith.constant 0 : index
    %c0_8 = arith.constant 0 : index
    %7 = vector.load %arg1[%c2, %c0_7, %c0_8] : memref<4x72x32xf32, #tpu.memory_space<vmem>>, vector<1x72x32xf32>
    %8 = vector.shape_cast %7 : vector<1x72x32xf32> to vector<72x32xf32>
    %cst_9 = arith.constant dense<0.000000e+00> : vector<72x128xf32>
    %9 = tpu.matmul %8, %0, %cst_9 {dimension_numbers = #tpu.dot_dimension_numbers<[1], [0], [0], [1], [0, 0, 1, 1], [], []>} : vector<72x32xf32>, vector<32x128xf32>, vector<72x128xf32> -> vector<72x128xf32>
    %c3 = arith.constant 3 : index
    %c0_10 = arith.constant 0 : index
    %c0_11 = arith.constant 0 : index
    %10 = vector.load %arg1[%c3, %c0_10, %c0_11] : memref<4x72x32xf32, #tpu.memory_space<vmem>>, vector<1x72x32xf32>
    %11 = vector.shape_cast %10 : vector<1x72x32xf32> to vector<72x32xf32>
    %cst_12 = arith.constant dense<0.000000e+00> : vector<72x128xf32>
    %12 = tpu.matmul %11, %0, %cst_12 {dimension_numbers = #tpu.dot_dimension_numbers<[1], [0], [0], [1], [0, 0, 1, 1], [], []>} : vector<72x32xf32>, vector<32x128xf32>, vector<72x128xf32> -> vector<72x128xf32>
    %13 = arith.maximumf %3, %6 : vector<72x128xf32>
    %14 = arith.maximumf %9, %12 : vector<72x128xf32>
    %15 = arith.maximumf %13, %14 : vector<72x128xf32>
    %16 = math.tanh %15 : vector<72x128xf32>
    %c0_13 = arith.constant 0 : index
    %c0_14 = arith.constant 0 : index
    %17 = vector.load %arg3[%c0_13, %c0_14] : memref<72x128xf32, #tpu.memory_space<vmem>>, vector<72x128xf32>
    tpu.vector_store %arg3[%c0_13, %c0_14], %16 {strides = array<i32>} : memref<72x128xf32, #tpu.memory_space<vmem>>, vector<72x128xf32>,
    return
  }
  func.func @transform_0(%arg0: i32) -> (i32, i32, i32) {
    %c0_i32 = arith.constant 0 : i32
    %c0_i32_0 = arith.constant 0 : i32
    %c0_i32_1 = arith.constant 0 : i32
    return %c0_i32, %arg0, %c0_i32_0 : i32, i32, i32
  }
  func.func @transform_1(%arg0: i32) -> (i32, i32) {
    %c0_i32 = arith.constant 0 : i32
    %c0_i32_0 = arith.constant 0 : i32
    %c0_i32_1 = arith.constant 0 : i32
    return %c0_i32, %c0_i32_0 : i32, i32
  }
  func.func @transform_2(%arg0: i32) -> (i32, i32) {
    %c0_i32 = arith.constant 0 : i32
    %c0_i32_0 = arith.constant 0 : i32
    return %arg0, %c0_i32 : i32, i32
  }
}

</mosaic_0001>

<llo_original>
// kernel: cs1_forward.1
$region0: #{cs1_forward.1}
  #allocation0 [shape = 'u32[]', space=smem, size = 0x4, offset = 0x4, fixed_abs, tag = 'smem constant byte address 0x4 - core index']
  #allocation1 [shape = 'u32[144,128]{1,0:T(1,128)}', space=vmem, size = 0x12000, scoped, tag = 'internal scratch']
  %s0 = inlined_call_operand.vmem [shape: f32[4,72,32], index: 0, kind: input, shape index: {}]
  %s1 = inlined_call_operand.vmem [shape: f32[32,128], index: 1, kind: input, shape index: {}]
  %s2 = inlined_call_operand.vmem [shape: f32[72,128], index: 2, kind: output, shape index: {}]
  %s3 = sld [smem:[#allocation0]]
  $region18: #{cs1_forward.1} parent=0
    _
  %s5 = ssub.s32 1, %s3
  %s6 = scalar_select 0, %s5, %s3
  // Predicated region
  $region2: #{cs1_forward.1} parent=0 // pred_check
    _
  $region3: #{cs1_forward.1} parent=0 // pred_check_branch
    %8 = sbr.rel (0) target = $region5
  $region4: #{cs1_forward.1} parent=0 // pred_region
    _
  $region5: #{cs1_forward.1} parent=0 // pred_fallthru
    _
  // Predicated region
  $region6: #{cs1_forward.1} parent=0 // pred_check
    _
  $region7: #{cs1_forward.1} parent=0 // pred_check_branch
    %10 = sbr.rel (0) target = $region9
  $region8: #{cs1_forward.1} parent=0 // pred_region
    _
  $region9: #{cs1_forward.1} parent=0 // pred_fallthru
    _
  %v11 = vld [vmem:[%s1] sm:$0xff]
  %v12 = vld [vmem:[%s1 + $0x8] sm:$0xff]
  %v13 = vld [vmem:[%s1 + $0x10] sm:$0xff]
  %v14 = vld [vmem:[%s1 + $0x18] sm:$0xff]
  %v15 = vld [vmem:[%s0] sm:$0xff]
  %v16 = vld [vmem:[%s0 + $0x8] sm:$0xff]
  %v17 = vld [vmem:[%s0 + $0x10] sm:$0xff]
  %v18 = vld [vmem:[%s0 + $0x18] sm:$0xff]
  %v19 = vld [vmem:[%s0 + $0x20] sm:$0xff]
  %v20 = vld [vmem:[%s0 + $0x28] sm:$0xff]
  %v21 = vld [vmem:[%s0 + $0x30] sm:$0xff]
  %v22 = vld [vmem:[%s0 + $0x38] sm:$0xff]
  %v23 = vld [vmem:[%s0 + $0x40] sm:$0xff]
  %vm24 = vcmask 261120
  %v26 = vsel %vm24, %v15, 0
  %v29 = vsel %vm24, %v16, 0
  %v32 = vsel %vm24, %v17, 0
  %v35 = vsel %vm24, %v18, 0
  %v38 = vsel %vm24, %v19, 0
  %v41 = vsel %vm24, %v20, 0
  %v44 = vsel %vm24, %v21, 0
  %v47 = vsel %vm24, %v22, 0
  %v50 = vsel %vm24, %v23, 0
  %52 = vmatprep.subr.mxu0 0.0
  %53 = vmatpush1.msra.mxu0 %v11
  %54 = vmatprep.subr.mxu0 0.0
  %55 = vmatpush1.msra.mxu0 %v12
  %56 = vmatprep.subr.mxu0 0.0
  %57 = vmatpush1.msra.mxu0 %v13
  %58 = vmatprep.subr.mxu0 0.0
  %59 = vmatpush1.msra.mxu0 %v14
  %60 = vmatprep.subr.mxu0 0.0
  %61 = vmatpush1.msra.mxu0 0.0
  %62 = vmatprep.subr.mxu0 0.0
  %63 = vmatpush1.msra.mxu0 0.0
  %64 = vmatprep.subr.mxu0 0.0
  %65 = vmatpush1.msra.mxu0 0.0
  %66 = vmatprep.subr.mxu0 0.0
  %67 = vmatpush1.msra.mxu0 0.0
  %68 = vmatprep.subr.mxu0 0.0
  %69 = vmatpush1.msra.mxu0 0.0
  %70 = vmatprep.subr.mxu0 0.0
  %71 = vmatpush1.msra.mxu0 0.0
  %72 = vmatprep.subr.mxu0 0.0
  %73 = vmatpush1.msra.mxu0 0.0
  %74 = vmatprep.subr.mxu0 0.0
  %75 = vmatpush1.msra.mxu0 0.0
  %76 = vmatprep.subr.mxu0 0.0
  %77 = vmatpush1.msra.mxu0 0.0
  %78 = vmatprep.subr.mxu0 0.0
  %79 = vmatpush1.msra.mxu0 0.0
  %80 = vmatprep.subr.mxu0 0.0
  %81 = vmatpush1.msra.mxu0 0.0
  %82 = vmatprep.subr.mxu0 0.0
  %83 = vmatpush1.msra.mxu0 0.0
  %84 = vmatprep.subr.mxu0 0.0
  %85 = vmatpush1.msra.mxu0 0.0
  %86 = vmatprep.subr.mxu0 0.0
  %87 = vmatpush1.msra.mxu0 0.0
  %88 = vmatprep.subr.mxu0 0.0
  %89 = vmatpush1.msra.mxu0 0.0
  %90 = vmatprep.subr.mxu0 0.0
  %91 = vmatpush1.msra.mxu0 0.0
  %92 = vmatprep.subr.mxu0 0.0
  %93 = vmatpush1.msra.mxu0 0.0
  %94 = vmatprep.subr.mxu0 0.0
  %95 = vmatpush1.msra.mxu0 0.0
  %96 = vmatprep.subr.mxu0 0.0
  %97 = vmatpush1.msra.mxu0 0.0
  %98 = vmatprep.subr.mxu0 0.0
  %99 = vmatpush1.msra.mxu0 0.0
  %100 = vmatprep.subr.mxu0 0.0
  %101 = vmatpush1.msra.mxu0 0.0
  %102 = vmatprep.subr.mxu0 0.0
  %103 = vmatpush1.msra.mxu0 0.0
  %104 = vmatprep.subr.mxu0 0.0
  %105 = vmatpush1.msra.mxu0 0.0
  %106 = vmatprep.subr.mxu0 0.0
  %107 = vmatpush1.msra.mxu0 0.0
  %108 = vmatprep.subr.mxu0 0.0
  %109 = vmatpush1.msra.mxu0 0.0
  %110 = vmatprep.subr.mxu0 0.0
  %111 = vmatpush1.msra.mxu0 0.0
  %112 = vmatprep.subr.mxu0 0.0
  %113 = vmatpush1.msra.mxu0 0.0
  %114 = vmatprep.subr.mxu0 0.0
  %115 = vmatpush1.msra.mxu0 0.0
  %116 = vmatprep.mubr.f32.mxu0 0.0
  %117 = vmatmul.mubr.f32.gmra.mrb[0].mxu0 %v26
  %v118 = vpop.f32.mrb[0].mxu0
  %v119 = vadd.f32 0.0, %v118
  %v120 = vpop.f32.mrb[0].mxu0
  %121 = vmatprep.mubr.f32.mxu0 0.0
  %122 = vmatmul.mubr.f32.gmra.mrb[0].mxu0 %v29
  %v123 = vpop.f32.mrb[0].mxu0
  %v124 = vadd.f32 0.0, %v123
  %v125 = vpop.f32.mrb[0].mxu0
  %126 = vmatprep.mubr.f32.mxu0 0.0
  %127 = vmatmul.mubr.f32.gmra.mrb[0].mxu0 %v32
  %v128 = vpop.f32.mrb[0].mxu0
  %v129 = vadd.f32 0.0, %v128
  %v130 = vpop.f32.mrb[0].mxu0
  %131 = vmatprep.mubr.f32.mxu0 0.0
  %132 = vmatmul.mubr.f32.gmra.mrb[0].mxu0 %v35
  %v133 = vpop.f32.mrb[0].mxu0
  %v134 = vadd.f32 0.0, %v133
  %v135 = vpop.f32.mrb[0].mxu0
  %136 = vmatprep.mubr.f32.mxu0 0.0
  %137 = vmatmul.mubr.f32.gmra.mrb[0].mxu0 %v38
  %v138 = vpop.f32.mrb[0].mxu0
  %v139 = vadd.f32 0.0, %v138
  %v140 = vpop.f32.mrb[0].mxu0
  %141 = vmatprep.mubr.f32.mxu0 0.0
  %142 = vmatmul.mubr.f32.gmra.mrb[0].mxu0 %v41
  %v143 = vpop.f32.mrb[0].mxu0
  %v144 = vadd.f32 0.0, %v143
  %v145 = vpop.f32.mrb[0].mxu0
  %146 = vmatprep.mubr.f32.mxu0 0.0
  %147 = vmatmul.mubr.f32.gmra.mrb[0].mxu0 %v44
  %v148 = vpop.f32.mrb[0].mxu0
  %v149 = vadd.f32 0.0, %v148
  %v150 = vpop.f32.mrb[0].mxu0
  %151 = vmatprep.mubr.f32.mxu0 0.0
  %152 = vmatmul.mubr.f32.gmra.mrb[0].mxu0 %v47
  %v153 = vpop.f32.mrb[0].mxu0
  %v154 = vadd.f32 0.0, %v153
  %v155 = vpop.f32.mrb[0].mxu0
  %156 = vmatprep.mubr.f32.mxu0 0.0
  %157 = vmatmul.mubr.f32.gmra.mrb[0].mxu0 %v50
  %v158 = vpop.f32.mrb[0].mxu0
  %v159 = vadd.f32 0.0, %v158
  %v160 = vpop.f32.mrb[0].mxu0
  %161 = vdwg.mxu0
  %s162 = scalar_lea.vmem %s0, 72
  %v163 = vld [vmem:[%s162] sm:$0xff]
  %v164 = vld [vmem:[%s162 + $0x8] sm:$0xff]
  %v165 = vld [vmem:[%s162 + $0x10] sm:$0xff]
  %v166 = vld [vmem:[%s162 + $0x18] sm:$0xff]
  %v167 = vld [vmem:[%s162 + $0x20] sm:$0xff]
  %v168 = vld [vmem:[%s162 + $0x28] sm:$0xff]
  %v169 = vld [vmem:[%s162 + $0x30] sm:$0xff]
  %v170 = vld [vmem:[%s162 + $0x38] sm:$0xff]
  %v171 = vld [vmem:[%s162 + $0x40] sm:$0xff]
  %v173 = vsel %vm24, %v163, 0
  %v176 = vsel %vm24, %v164, 0
  %v179 = vsel %vm24, %v165, 0
  %v182 = vsel %vm24, %v166, 0
  %v185 = vsel %vm24, %v167, 0
  %v188 = vsel %vm24, %v168, 0
  %v191 = vsel %vm24, %v169, 0
  %v194 = vsel %vm24, %v170, 0
  %v197 = vsel %vm24, %v171, 0
  %199 = vmatprep.subr.mxu0 0.0
  %200 = vmatpush1.msra.mxu0 %v11
  %201 = vmatprep.subr.mxu0 0.0
  %202 = vmatpush1.msra.mxu0 %v12
  %203 = vmatprep.subr.mxu0 0.0
  %204 = vmatpush1.msra.mxu0 %v13
  %205 = vmatprep.subr.mxu0 0.0
  %206 = vmatpush1.msra.mxu0 %v14
  %207 = vmatprep.subr.mxu0 0.0
  %208 = vmatpush1.msra.mxu0 0.0
  %209 = vmatprep.subr.mxu0 0.0
  %210 = vmatpush1.msra.mxu0 0.0
  %211 = vmatprep.subr.mxu0 0.0
  %212 = vmatpush1.msra.mxu0 0.0
  %213 = vmatprep.subr.mxu0 0.0
  %214 = vmatpush1.msra.mxu0 0.0
  %215 = vmatprep.subr.mxu0 0.0
  %216 = vmatpush1.msra.mxu0 0.0
  %217 = vmatprep.subr.mxu0 0.0
  %218 = vmatpush1.msra.mxu0 0.0
  %219 = vmatprep.subr.mxu0 0.0
  %220 = vmatpush1.msra.mxu0 0.0
  %221 = vmatprep.subr.mxu0 0.0
  %222 = vmatpush1.msra.mxu0 0.0
  %223 = vmatprep.subr.mxu0 0.0
  %224 = vmatpush1.msra.mxu0 0.0
  %225 = vmatprep.subr.mxu0 0.0
  %226 = vmatpush1.msra.mxu0 0.0
  %227 = vmatprep.subr.mxu0 0.0
  %228 = vmatpush1.msra.mxu0 0.0
  %229 = vmatprep.subr.mxu0 0.0
  %230 = vmatpush1.msra.mxu0 0.0
  %231 = vmatprep.subr.mxu0 0.0
  %232 = vmatpush1.msra.mxu0 0.0
  %233 = vmatprep.subr.mxu0 0.0
  %234 = vmatpush1.msra.mxu0 0.0
  %235 = vmatprep.subr.mxu0 0.0
  %236 = vmatpush1.msra.mxu0 0.0
  %237 = vmatprep.subr.mxu0 0.0
  %238 = vmatpush1.msra.mxu0 0.0
  %239 = vmatprep.subr.mxu0 0.0
  %240 = vmatpush1.msra.mxu0 0.0
  %241 = vmatprep.subr.mxu0 0.0
  %242 = vmatpush1.msra.mxu0 0.0
  %243 = vmatprep.subr.mxu0 0.0
  %244 = vmatpush1.msra.mxu0 0.0
  %245 = vmatprep.subr.mxu0 0.0
  %246 = vmatpush1.msra.mxu0 0.0
  %247 = vmatprep.subr.mxu0 0.0
  %248 = vmatpush1.msra.mxu0 0.0
  %249 = vmatprep.subr.mxu0 0.0
  %250 = vmatpush1.msra.mxu0 0.0
  %251 = vmatprep.subr.mxu0 0.0
  %252 = vmatpush1.msra.mxu0 0.0
  %253 = vmatprep.subr.mxu0 0.0
  %254 = vmatpush1.msra.mxu0 0.0
  %255 = vmatprep.subr.mxu0 0.0
  %256 = vmatpush1.msra.mxu0 0.0
  %257 = vmatprep.subr.mxu0 0.0
  %258 = vmatpush1.msra.mxu0 0.0
  %259 = vmatprep.subr.mxu0 0.0
  %260 = vmatpush1.msra.mxu0 0.0
  %261 = vmatprep.subr.mxu0 0.0
  %262 = vmatpush1.msra.mxu0 0.0
  %263 = vmatprep.mubr.f32.mxu0 0.0
  %264 = vmatmul.mubr.f32.gmra.mrb[0].mxu0 %v173
  %v265 = vpop.f32.mrb[0].mxu0
  %v266 = vadd.f32 0.0, %v265
  %v267 = vpop.f32.mrb[0].mxu0
  %268 = vmatprep.mubr.f32.mxu0 0.0
  %269 = vmatmul.mubr.f32.gmra.mrb[0].mxu0 %v176
  %v270 = vpop.f32.mrb[0].mxu0
  %v271 = vadd.f32 0.0, %v270
  %v272 = vpop.f32.mrb[0].mxu0
  %273 = vmatprep.mubr.f32.mxu0 0.0
  %274 = vmatmul.mubr.f32.gmra.mrb[0].mxu0 %v179
  %v275 = vpop.f32.mrb[0].mxu0
  %v276 = vadd.f32 0.0, %v275
  %v277 = vpop.f32.mrb[0].mxu0
  %278 = vmatprep.mubr.f32.mxu0 0.0
  %279 = vmatmul.mubr.f32.gmra.mrb[0].mxu0 %v182
  %v280 = vpop.f32.mrb[0].mxu0
  %v281 = vadd.f32 0.0, %v280
  %v282 = vpop.f32.mrb[0].mxu0
  %283 = vmatprep.mubr.f32.mxu0 0.0
  %284 = vmatmul.mubr.f32.gmra.mrb[0].mxu0 %v185
  %v285 = vpop.f32.mrb[0].mxu0
  %v286 = vadd.f32 0.0, %v285
  %v287 = vpop.f32.mrb[0].mxu0
  %288 = vmatprep.mubr.f32.mxu0 0.0
  %289 = vmatmul.mubr.f32.gmra.mrb[0].mxu0 %v188
  %v290 = vpop.f32.mrb[0].mxu0
  %v291 = vadd.f32 0.0, %v290
  %v292 = vpop.f32.mrb[0].mxu0
  %293 = vmatprep.mubr.f32.mxu0 0.0
  %294 = vmatmul.mubr.f32.gmra.mrb[0].mxu0 %v191
  %v295 = vpop.f32.mrb[0].mxu0
  %v296 = vadd.f32 0.0, %v295
  %v297 = vpop.f32.mrb[0].mxu0
  %298 = vmatprep.mubr.f32.mxu0 0.0
  %299 = vmatmul.mubr.f32.gmra.mrb[0].mxu0 %v194
  %v300 = vpop.f32.mrb[0].mxu0
  %v301 = vadd.f32 0.0, %v300
  %v302 = vpop.f32.mrb[0].mxu0
  %303 = vmatprep.mubr.f32.mxu0 0.0
  %304 = vmatmul.mubr.f32.gmra.mrb[0].mxu0 %v197
  %v305 = vpop.f32.mrb[0].mxu0
  %v306 = vadd.f32 0.0, %v305
  %v307 = vpop.f32.mrb[0].mxu0
  %308 = vdwg.mxu0
  %s309 = scalar_lea.vmem %s0, 144
  %v310 = vld [vmem:[%s309] sm:$0xff]
  %v311 = vld [vmem:[%s309 + $0x8] sm:$0xff]
  %v312 = vld [vmem:[%s309 + $0x10] sm:$0xff]
  %v313 = vld [vmem:[%s309 + $0x18] sm:$0xff]
  %v314 = vld [vmem:[%s309 + $0x20] sm:$0xff]
  %v315 = vld [vmem:[%s309 + $0x28] sm:$0xff]
  %v316 = vld [vmem:[%s309 + $0x30] sm:$0xff]
  %v317 = vld [vmem:[%s309 + $0x38] sm:$0xff]
  %v318 = vld [vmem:[%s309 + $0x40] sm:$0xff]
  %v320 = vsel %vm24, %v310, 0
  %v323 = vsel %vm24, %v311, 0
  %v326 = vsel %vm24, %v312, 0
  %v329 = vsel %vm24, %v313, 0
  %v332 = vsel %vm24, %v314, 0
  %v335 = vsel %vm24, %v315, 0
  %v338 = vsel %vm24, %v316, 0
  %v341 = vsel %vm24, %v317, 0
  %v344 = vsel %vm24, %v318, 0
  %346 = vmatprep.subr.mxu0 0.0
  %347 = vmatpush1.msra.mxu0 %v11
  %348 = vmatprep.subr.mxu0 0.0
  %349 = vmatpush1.msra.mxu0 %v12
  %350 = vmatprep.subr.mxu0 0.0
  %351 = vmatpush1.msra.mxu0 %v13
  %352 = vmatprep.subr.mxu0 0.0
  %353 = vmatpush1.msra.mxu0 %v14
  %354 = vmatprep.subr.mxu0 0.0
  %355 = vmatpush1.msra.mxu0 0.0
  %356 = vmatprep.subr.mxu0 0.0
  %357 = vmatpush1.msra.mxu0 0.0
  %358 = vmatprep.subr.mxu0 0.0
  %359 = vmatpush1.msra.mxu0 0.0
  %360 = vmatprep.subr.mxu0 0.0
  %361 = vmatpush1.msra.mxu0 0.0
  %362 = vmatprep.subr.mxu0 0.0
  %363 = vmatpush1.msra.mxu0 0.0
  %364 = vmatprep.subr.mxu0 0.0
  %365 = vmatpush1.msra.mxu0 0.0
  %366 = vmatprep.subr.mxu0 0.0
  %367 = vmatpush1.msra.mxu0 0.0
  %368 = vmatprep.subr.mxu0 0.0
  %369 = vmatpush1.msra.mxu0 0.0
  %370 = vmatprep.subr.mxu0 0.0
  %371 = vmatpush1.msra.mxu0 0.0
  %372 = vmatprep.subr.mxu0 0.0
  %373 = vmatpush1.msra.mxu0 0.0
  %374 = vmatprep.subr.mxu0 0.0
  %375 = vmatpush1.msra.mxu0 0.0
  %376 = vmatprep.subr.mxu0 0.0
  %377 = vmatpush1.msra.mxu0 0.0
  %378 = vmatprep.subr.mxu0 0.0
  %379 = vmatpush1.msra.mxu0 0.0
  %380 = vmatprep.subr.mxu0 0.0
  %381 = vmatpush1.msra.mxu0 0.0
  %382 = vmatprep.subr.mxu0 0.0
  %383 = vmatpush1.msra.mxu0 0.0
  %384 = vmatprep.subr.mxu0 0.0
  %385 = vmatpush1.msra.mxu0 0.0
  %386 = vmatprep.subr.mxu0 0.0
  %387 = vmatpush1.msra.mxu0 0.0
  %388 = vmatprep.subr.mxu0 0.0
  %389 = vmatpush1.msra.mxu0 0.0
  %390 = vmatprep.subr.mxu0 0.0
  %391 = vmatpush1.msra.mxu0 0.0
  %392 = vmatprep.subr.mxu0 0.0
  %393 = vmatpush1.msra.mxu0 0.0
  %394 = vmatprep.subr.mxu0 0.0
  %395 = vmatpush1.msra.mxu0 0.0
  %396 = vmatprep.subr.mxu0 0.0
  %397 = vmatpush1.msra.mxu0 0.0
  %398 = vmatprep.subr.mxu0 0.0
  %399 = vmatpush1.msra.mxu0 0.0
  %400 = vmatprep.subr.mxu0 0.0
  %401 = vmatpush1.msra.mxu0 0.0
  %402 = vmatprep.subr.mxu0 0.0
  %403 = vmatpush1.msra.mxu0 0.0
  %404 = vmatprep.subr.mxu0 0.0
  %405 = vmatpush1.msra.mxu0 0.0
  %406 = vmatprep.subr.mxu0 0.0
  %407 = vmatpush1.msra.mxu0 0.0
  %408 = vmatprep.subr.mxu0 0.0
  %409 = vmatpush1.msra.mxu0 0.0
  %410 = vmatprep.mubr.f32.mxu0 0.0
  %411 = vmatmul.mubr.f32.gmra.mrb[0].mxu0 %v320
  %v412 = vpop.f32.mrb[0].mxu0
  %v413 = vadd.f32 0.0, %v412
  %v414 = vpop.f32.mrb[0].mxu0
  %415 = vmatprep.mubr.f32.mxu0 0.0
  %416 = vmatmul.mubr.f32.gmra.mrb[0].mxu0 %v323
  %v417 = vpop.f32.mrb[0].mxu0
  %v418 = vadd.f32 0.0, %v417
  %v419 = vpop.f32.mrb[0].mxu0
  %420 = vmatprep.mubr.f32.mxu0 0.0
  %421 = vmatmul.mubr.f32.gmra.mrb[0].mxu0 %v326
  %v422 = vpop.f32.mrb[0].mxu0
  %v423 = vadd.f32 0.0, %v422
  %v424 = vpop.f32.mrb[0].mxu0
  %425 = vmatprep.mubr.f32.mxu0 0.0
  %426 = vmatmul.mubr.f32.gmra.mrb[0].mxu0 %v329
  %v427 = vpop.f32.mrb[0].mxu0
  %v428 = vadd.f32 0.0, %v427
  %v429 = vpop.f32.mrb[0].mxu0
  %430 = vmatprep.mubr.f32.mxu0 0.0
  %431 = vmatmul.mubr.f32.gmra.mrb[0].mxu0 %v332
  %v432 = vpop.f32.mrb[0].mxu0
  %v433 = vadd.f32 0.0, %v432
  %v434 = vpop.f32.mrb[0].mxu0
  %435 = vmatprep.mubr.f32.mxu0 0.0
  %436 = vmatmul.mubr.f32.gmra.mrb[0].mxu0 %v335
  %v437 = vpop.f32.mrb[0].mxu0
  %v438 = vadd.f32 0.0, %v437
  %v439 = vpop.f32.mrb[0].mxu0
  %440 = vmatprep.mubr.f32.mxu0 0.0
  %441 = vmatmul.mubr.f32.gmra.mrb[0].mxu0 %v338
  %v442 = vpop.f32.mrb[0].mxu0
  %v443 = vadd.f32 0.0, %v442
  %v444 = vpop.f32.mrb[0].mxu0
  %445 = vmatprep.mubr.f32.mxu0 0.0
  %446 = vmatmul.mubr.f32.gmra.mrb[0].mxu0 %v341
  %v447 = vpop.f32.mrb[0].mxu0
  %v448 = vadd.f32 0.0, %v447
  %v449 = vpop.f32.mrb[0].mxu0
  %450 = vmatprep.mubr.f32.mxu0 0.0
  %451 = vmatmul.mubr.f32.gmra.mrb[0].mxu0 %v344
  %v452 = vpop.f32.mrb[0].mxu0
  %v453 = vadd.f32 0.0, %v452
  %v454 = vpop.f32.mrb[0].mxu0
  %455 = vdwg.mxu0
  %s456 = scalar_lea.vmem %s0, 216
  %v457 = vld [vmem:[%s456] sm:$0xff]
  %v458 = vld [vmem:[%s456 + $0x8] sm:$0xff]
  %v459 = vld [vmem:[%s456 + $0x10] sm:$0xff]
  %v460 = vld [vmem:[%s456 + $0x18] sm:$0xff]
  %v461 = vld [vmem:[%s456 + $0x20] sm:$0xff]
  %v462 = vld [vmem:[%s456 + $0x28] sm:$0xff]
  %v463 = vld [vmem:[%s456 + $0x30] sm:$0xff]
  %v464 = vld [vmem:[%s456 + $0x38] sm:$0xff]
  %v465 = vld [vmem:[%s456 + $0x40] sm:$0xff]
  %v467 = vsel %vm24, %v457, 0
  %v470 = vsel %vm24, %v458, 0
  %v473 = vsel %vm24, %v459, 0
  %v476 = vsel %vm24, %v460, 0
  %v479 = vsel %vm24, %v461, 0
  %v482 = vsel %vm24, %v462, 0
  %v485 = vsel %vm24, %v463, 0
  %v488 = vsel %vm24, %v464, 0
  %v491 = vsel %vm24, %v465, 0
  %493 = vmatprep.subr.mxu0 0.0
  %494 = vmatpush1.msra.mxu0 %v11
  %495 = vmatprep.subr.mxu0 0.0
  %496 = vmatpush1.msra.mxu0 %v12
  %497 = vmatprep.subr.mxu0 0.0
  %498 = vmatpush1.msra.mxu0 %v13
  %499 = vmatprep.subr.mxu0 0.0
  %500 = vmatpush1.msra.mxu0 %v14
  %501 = vmatprep.subr.mxu0 0.0
  %502 = vmatpush1.msra.mxu0 0.0
  %503 = vmatprep.subr.mxu0 0.0
  %504 = vmatpush1.msra.mxu0 0.0
  %505 = vmatprep.subr.mxu0 0.0
  %506 = vmatpush1.msra.mxu0 0.0
  %507 = vmatprep.subr.mxu0 0.0
  %508 = vmatpush1.msra.mxu0 0.0
  %509 = vmatprep.subr.mxu0 0.0
  %510 = vmatpush1.msra.mxu0 0.0
  %511 = vmatprep.subr.mxu0 0.0
  %512 = vmatpush1.msra.mxu0 0.0
  %513 = vmatprep.subr.mxu0 0.0
  %514 = vmatpush1.msra.mxu0 0.0
  %515 = vmatprep.subr.mxu0 0.0
  %516 = vmatpush1.msra.mxu0 0.0
  %517 = vmatprep.subr.mxu0 0.0
  %518 = vmatpush1.msra.mxu0 0.0
  %519 = vmatprep.subr.mxu0 0.0
  %520 = vmatpush1.msra.mxu0 0.0
  %521 = vmatprep.subr.mxu0 0.0
  %522 = vmatpush1.msra.mxu0 0.0
  %523 = vmatprep.subr.mxu0 0.0
  %524 = vmatpush1.msra.mxu0 0.0
  %525 = vmatprep.subr.mxu0 0.0
  %526 = vmatpush1.msra.mxu0 0.0
  %527 = vmatprep.subr.mxu0 0.0
  %528 = vmatpush1.msra.mxu0 0.0
  %529 = vmatprep.subr.mxu0 0.0
  %530 = vmatpush1.msra.mxu0 0.0
  %531 = vmatprep.subr.mxu0 0.0
  %532 = vmatpush1.msra.mxu0 0.0
  %533 = vmatprep.subr.mxu0 0.0
  %534 = vmatpush1.msra.mxu0 0.0
  %535 = vmatprep.subr.mxu0 0.0
  %536 = vmatpush1.msra.mxu0 0.0
  %537 = vmatprep.subr.mxu0 0.0
  %538 = vmatpush1.msra.mxu0 0.0
  %539 = vmatprep.subr.mxu0 0.0
  %540 = vmatpush1.msra.mxu0 0.0
  %541 = vmatprep.subr.mxu0 0.0
  %542 = vmatpush1.msra.mxu0 0.0
  %543 = vmatprep.subr.mxu0 0.0
  %544 = vmatpush1.msra.mxu0 0.0
  %545 = vmatprep.subr.mxu0 0.0
  %546 = vmatpush1.msra.mxu0 0.0
  %547 = vmatprep.subr.mxu0 0.0
  %548 = vmatpush1.msra.mxu0 0.0
  %549 = vmatprep.subr.mxu0 0.0
  %550 = vmatpush1.msra.mxu0 0.0
  %551 = vmatprep.subr.mxu0 0.0
  %552 = vmatpush1.msra.mxu0 0.0
  %553 = vmatprep.subr.mxu0 0.0
  %554 = vmatpush1.msra.mxu0 0.0
  %555 = vmatprep.subr.mxu0 0.0
  %556 = vmatpush1.msra.mxu0 0.0
  %557 = vmatprep.mubr.f32.mxu0 0.0
  %558 = vmatmul.mubr.f32.gmra.mrb[0].mxu0 %v467
  %v559 = vpop.f32.mrb[0].mxu0
  %v560 = vadd.f32 0.0, %v559
  %v561 = vpop.f32.mrb[0].mxu0
  %562 = vmatprep.mubr.f32.mxu0 0.0
  %563 = vmatmul.mubr.f32.gmra.mrb[0].mxu0 %v470
  %v564 = vpop.f32.mrb[0].mxu0
  %v565 = vadd.f32 0.0, %v564
  %v566 = vpop.f32.mrb[0].mxu0
  %567 = vmatprep.mubr.f32.mxu0 0.0
  %568 = vmatmul.mubr.f32.gmra.mrb[0].mxu0 %v473
  %v569 = vpop.f32.mrb[0].mxu0
  %v570 = vadd.f32 0.0, %v569
  %v571 = vpop.f32.mrb[0].mxu0
  %572 = vmatprep.mubr.f32.mxu0 0.0
  %573 = vmatmul.mubr.f32.gmra.mrb[0].mxu0 %v476
  %v574 = vpop.f32.mrb[0].mxu0
  %v575 = vadd.f32 0.0, %v574
  %v576 = vpop.f32.mrb[0].mxu0
  %577 = vmatprep.mubr.f32.mxu0 0.0
  %578 = vmatmul.mubr.f32.gmra.mrb[0].mxu0 %v479
  %v579 = vpop.f32.mrb[0].mxu0
  %v580 = vadd.f32 0.0, %v579
  %v581 = vpop.f32.mrb[0].mxu0
  %582 = vmatprep.mubr.f32.mxu0 0.0
  %583 = vmatmul.mubr.f32.gmra.mrb[0].mxu0 %v482
  %v584 = vpop.f32.mrb[0].mxu0
  %v585 = vadd.f32 0.0, %v584
  %v586 = vpop.f32.mrb[0].mxu0
  %587 = vmatprep.mubr.f32.mxu0 0.0
  %588 = vmatmul.mubr.f32.gmra.mrb[0].mxu0 %v485
  %v589 = vpop.f32.mrb[0].mxu0
  %v590 = vadd.f32 0.0, %v589
  %v591 = vpop.f32.mrb[0].mxu0
  %592 = vmatprep.mubr.f32.mxu0 0.0
  %593 = vmatmul.mubr.f32.gmra.mrb[0].mxu0 %v488
  %v594 = vpop.f32.mrb[0].mxu0
  %v595 = vadd.f32 0.0, %v594
  %v596 = vpop.f32.mrb[0].mxu0
  %597 = vmatprep.mubr.f32.mxu0 0.0
  %598 = vmatmul.mubr.f32.gmra.mrb[0].mxu0 %v491
  %v599 = vpop.f32.mrb[0].mxu0
  %v600 = vadd.f32 0.0, %v599
  %v601 = vpop.f32.mrb[0].mxu0
  %602 = vdwg.mxu0
  %v603 = vmax.f32 %v119, %v266
  %v604 = vmax.f32 %v124, %v271
  %v605 = vmax.f32 %v129, %v276
  %v606 = vmax.f32 %v134, %v281
  %v607 = vmax.f32 %v139, %v286
  %v608 = vmax.f32 %v144, %v291
  %v609 = vmax.f32 %v149, %v296
  %v610 = vmax.f32 %v154, %v301
  %v611 = vmax.f32 %v159, %v306
  %v612 = vmax.f32 %v413, %v560
  %v613 = vmax.f32 %v418, %v565
  %v614 = vmax.f32 %v423, %v570
  %v615 = vmax.f32 %v428, %v575
  %v616 = vmax.f32 %v433, %v580
  %v617 = vmax.f32 %v438, %v585
  %v618 = vmax.f32 %v443, %v590
  %v619 = vmax.f32 %v448, %v595
  %v620 = vmax.f32 %v453, %v600
  %v621 = vmax.f32 %v603, %v612
  %v622 = vmax.f32 %v604, %v613
  %v623 = vmax.f32 %v605, %v614
  %v624 = vmax.f32 %v606, %v615
  %v625 = vmax.f32 %v607, %v616
  %v626 = vmax.f32 %v608, %v617
  %v627 = vmax.f32 %v609, %v618
  %v628 = vmax.f32 %v610, %v619
  %v629 = vmax.f32 %v611, %v620
  %v630 = vtanh.pop %v621
  %v631 = vtanh.pop %v622
  %v632 = vtanh.pop %v623
  %v633 = vtanh.pop %v624
  %v634 = vtanh.pop %v625
  %v635 = vtanh.pop %v626
  %v636 = vtanh.pop %v627
  %v637 = vtanh.pop %v628
  %v638 = vtanh.pop %v629
  %639 = vst [vmem:[%s2] sm:$0xff] %v630
  %640 = vst [vmem:[%s2 + $0x8] sm:$0xff] %v631
  %641 = vst [vmem:[%s2 + $0x10] sm:$0xff] %v632
  %642 = vst [vmem:[%s2 + $0x18] sm:$0xff] %v633
  %643 = vst [vmem:[%s2 + $0x20] sm:$0xff] %v634
  %644 = vst [vmem:[%s2 + $0x28] sm:$0xff] %v635
  %645 = vst [vmem:[%s2 + $0x30] sm:$0xff] %v636
  %646 = vst [vmem:[%s2 + $0x38] sm:$0xff] %v637
  %647 = vst [vmem:[%s2 + $0x40] sm:$0xff] %v638
  // Predicated region
  $region10: #{cs1_forward.1} parent=0 // pred_check
    _
  $region11: #{cs1_forward.1} parent=0 // pred_check_branch
    %649 = sbr.rel (0) target = $region13
  $region12: #{cs1_forward.1} parent=0 // pred_region
    _
  $region13: #{cs1_forward.1} parent=0 // pred_fallthru
    _
  // Predicated region
  $region14: #{cs1_forward.1} parent=0 // pred_check
    _
  $region15: #{cs1_forward.1} parent=0 // pred_check_branch
    %651 = sbr.rel (0) target = $region17
  $region16: #{cs1_forward.1} parent=0 // pred_region
    _
  $region17: #{cs1_forward.1} parent=0 // pred_fallthru
    _

</llo_original>
